<compile_context>
chip_gen: v6e
topology: v6e:2x2x1
jax: 0.10.0
libtpu: 0.0.40
codegen_flags: <defaults>
</compile_context>

<pallas_src>
import functools

import jax
import jax.numpy as jnp
from jax import lax
from jax.experimental import pallas as pl
from jax.experimental.pallas import tpu as pltpu

LANES = 128        # vreg lane width
CHUNK_ROWS = 16    # inner-loop chunk height (bf16-native (16,128) tile; 2 f32 vregs)
MOMENTS = 5        # sum x, sum y, sum x*y, sum x*x, sum y*y


def _cdiv(a, b):
    return -(-a // b)


def _round_up(a, b):
    return _cdiv(a, b) * b


def _device_kind() -> str:
    try:
        return jax.devices()[0].device_kind.lower()
    except Exception:
        return ""


def _num_tensorcores() -> int:
    """TensorCores per device: 2 on v7x / v4 / v5p (megacore), 1 on v5e / v6e."""
    try:
        info = pltpu.get_tpu_info()
        for attr in ("num_cores", "num_cores_per_chip", "core_count", "num_tensorcores"):
            v = getattr(info, attr, None)
            if isinstance(v, int) and 1 <= v <= 8:
                return v
    except Exception:
        pass
    kind = _device_kind()
    if "lite" in kind or "v5e" in kind or "v6" in kind:
        return 1
    if "v7" in kind or "7x" in kind or "v4" in kind or "v5" in kind:
        return 2
    return 1


def _max_block_rows(itemsize: int) -> int:
    """Generation-aware streaming block height (rows of 128 lanes)."""
    kind = _device_kind()
    if "v7" in kind or "7x" in kind:
        base = 8192     # 4 MiB f32 per input block: amortize per-step overhead at 3.2 TB/s
    elif "v6" in kind:
        base = 4096     # 2 MiB
    else:
        base = 2048     # 1 MiB: keep v5e under its 16 MiB default scoped-VMEM limit
    return base * max(1, 4 // max(1, itemsize))   # 2x rows for sub-32-bit inputs


def _accumulate_block(x_ref, y_ref, out_ref, cx, cy, *, num_chunks, masked,
                      n_valid, block_elem_start, unroll):
    """Stream one (block_rows, 128) block through five vreg accumulators."""
    zeros = jnp.zeros((CHUNK_ROWS, LANES), jnp.float32)
    if masked:
        intra = (lax.broadcasted_iota(jnp.int32, (CHUNK_ROWS, LANES), 0) * LANES
                 + lax.broadcasted_iota(jnp.int32, (CHUNK_ROWS, LANES), 1))

    def body(j, carry):
        sx, sy, sxy, sxx, syy = carry
        r0 = pl.multiple_of(j * CHUNK_ROWS, CHUNK_ROWS)
        xv = x_ref[pl.ds(r0, CHUNK_ROWS), :].astype(jnp.float32)
        yv = y_ref[pl.ds(r0, CHUNK_ROWS), :].astype(jnp.float32)
        xs = xv - cx
        ys = yv - cy
        if masked:
            valid = (intra + (block_elem_start + j * (CHUNK_ROWS * LANES))) < n_valid
            xs = jnp.where(valid, xs, 0.0)
            ys = jnp.where(valid, ys, 0.0)
        return (sx + xs, sy + ys, sxy + xs * ys, sxx + xs * xs, syy + ys * ys)

    carry = lax.fori_loop(0, num_chunks, body, (zeros,) * MOMENTS, unroll=unroll)
    for k, part in enumerate(carry):
        out_ref[0, k] += part


def _pearson_moments_kernel(shift_ref, x_ref, y_ref, out_ref, *, n_valid,
                            block_rows, steps_per_core, last_block):
    core = pl.program_id(0)
    step = pl.program_id(1)

    @pl.when(step == 0)
    def _init():
        out_ref[...] = jnp.zeros(out_ref.shape, out_ref.dtype)

    cx = shift_ref[0]
    cy = shift_ref[1]
    nominal_block = core * steps_per_core + step
    block_elem_start = nominal_block * (block_rows * LANES)
    num_chunks = block_rows // CHUNK_ROWS
    unroll = max(1, min(8, num_chunks))
    common = dict(num_chunks=num_chunks, n_valid=n_valid,
                  block_elem_start=block_elem_start, unroll=unroll)

    # Interior blocks are fully valid: lean unmasked hot loop.
    @pl.when(nominal_block < last_block)
    def _interior():
        _accumulate_block(x_ref, y_ref, out_ref, cx, cy, masked=False, **common)

    # The single globally-last block: mask the ragged tail by element index.
    # Blocks past last_block are clamped duplicates from the index_map and skipped.
    @pl.when(nominal_block == last_block)
    def _tail():
        _accumulate_block(x_ref, y_ref, out_ref, cx, cy, masked=True, **common)


def pearson_loss(x: jax.Array, y: jax.Array) -> jax.Array:
    """1 - Pearson correlation; matches PyTorch PearsonLoss.forward on 1-D inputs.

    Accepts f32 or bf16 inputs (bf16 halves HBM traffic); accumulation is f32.
    """
    assert x.shape == y.shape and x.ndim == 1, "PearsonLoss expects matching 1-D inputs"
    n = x.shape[0]
    assert n >= 1

    # Shift both series by their first element before accumulating raw moments
    # (Pearson r is shift-invariant): avoids catastrophic cancellation of the
    # single-pass formula when |mean| >> std.
    shifts = jnp.stack([x[0].astype(jnp.float32), y[0].astype(jnp.float32)])

    rows = _cdiv(n, LANES)
    if n % LANES:
        # TODO(synk): only lane-unaligned n pays this copy; a fully copy-free
        # ragged tail would require a manual-DMA 1-D kernel (pl.ANY + async_copy).
        pad = rows * LANES - n
        x = jnp.concatenate([x, jnp.zeros((pad,), x.dtype)])
        y = jnp.concatenate([y, jnp.zeros((pad,), y.dtype)])
    x2 = x.reshape(rows, LANES)        # free (metadata-only) when n % 128 == 0
    y2 = y.reshape(rows, LANES)

    itemsize = max(x2.dtype.itemsize, y2.dtype.itemsize)
    num_cores = _num_tensorcores()
    if rows < 2 * CHUNK_ROWS:
        num_cores = 1
    block_rows = min(_max_block_rows(itemsize),
                     _round_up(max(_cdiv(rows, num_cores), 1), CHUNK_ROWS))
    steps_per_core = _cdiv(rows, num_cores * block_rows)
    last_block = _cdiv(rows, block_rows) - 1

    def in_index_map(c, i):
        # Clamp so any (core, step) beyond the data re-reads the last (partial)
        # block; its contribution is masked out inside the kernel.
        return (jnp.minimum(c * steps_per_core + i, last_block), 0)

    in_spec = pl.BlockSpec((block_rows, LANES), in_index_map)

    kernel = functools.partial(
        _pearson_moments_kernel, n_valid=n, block_rows=block_rows,
        steps_per_core=steps_per_core, last_block=last_block)

    block_bytes = block_rows * LANES * itemsize
    vmem_limit = int(min(4 * block_bytes + (4 << 20), 40 << 20))

    moments = pl.pallas_call(
        kernel,
        out_shape=jax.ShapeDtypeStruct((num_cores, MOMENTS, CHUNK_ROWS, LANES),
                                       jnp.float32),
        grid=(num_cores, steps_per_core),
        in_specs=[
            pl.BlockSpec(memory_space=pltpu.MemorySpace.SMEM),   # shifts (2,) f32
            in_spec,
            in_spec,
        ],
        out_specs=pl.BlockSpec((1, MOMENTS, CHUNK_ROWS, LANES),
                               lambda c, i: (c, 0, 0, 0)),
        compiler_params=pltpu.CompilerParams(
            dimension_semantics=("parallel", "arbitrary"),
            vmem_limit_bytes=vmem_limit,
        ),
        cost_estimate=pl.CostEstimate(
            flops=10 * n,
            transcendentals=0,
            bytes_accessed=int(x2.size * x2.dtype.itemsize
                               + y2.size * y2.dtype.itemsize
                               + num_cores * MOMENTS * CHUNK_ROWS * LANES * 4),
        ),
    )(shifts, x2, y2)

    # O(1) finalize in plain JAX: combine per-core vector partials, scalar formula.
    m = jnp.sum(moments, axis=(0, 2, 3))                  # (5,) shifted raw moments
    sx, sy, sxy, sxx, syy = m[0], m[1], m[2], m[3], m[4]
    n_f = jnp.float32(n)
    mean_xs = sx / n_f
    mean_ys = sy / n_f
    r_num = sxy - n_f * mean_xs * mean_ys                 # xm . ym
    var_x = jnp.maximum(sxx - n_f * mean_xs * mean_xs, 0.0)
    var_y = jnp.maximum(syy - n_f * mean_ys * mean_ys, 0.0)
    r_den = jnp.maximum(jnp.sqrt(var_x) * jnp.sqrt(var_y), jnp.float32(1e-6))
    r_val = jnp.clip(r_num / r_den, -1.0, 1.0)
    return jnp.float32(1.0) - r_val


def _reference(x, y):
    x = x.astype(jnp.float32)
    y = y.astype(jnp.float32)
    xm = x - jnp.mean(x)
    ym = y - jnp.mean(y)
    r_num = jnp.dot(xm, ym)
    r_den = jnp.maximum(jnp.linalg.norm(xm) * jnp.linalg.norm(ym), 1e-6)
    r_val = jnp.clip(r_num / r_den, -1.0, 1.0)
    return 1.0 - r_val


if __name__ == "__main__":
    key = jax.random.PRNGKey(0)
    kx, ky = jax.random.split(key)

    # (n, dtype): block-aligned f32, lane-unaligned f32 (masked tail), bf16 path.
    cases = ((4096, jnp.float32), (5000, jnp.float32), (5000, jnp.bfloat16))
    for n, dtype in cases:
        # Non-zero mean + correlation so the shift and the formula are exercised.
        xf = jax.random.normal(kx, (n,), dtype=jnp.float32) * 2.0 + 3.0
        yf = 0.5 * xf + 0.5 * jax.random.normal(ky, (n,), dtype=jnp.float32) + 1.0
        xd = xf.astype(dtype)
        yd = yf.astype(dtype)

        loss = jax.block_until_ready(pearson_loss(xd, yd))
        ref = jax.block_until_ready(_reference(xd, yd))
        tol = 2e-3 if dtype == jnp.bfloat16 else 1e-4
        assert jnp.allclose(loss, ref, atol=tol, rtol=tol), (n, dtype, loss, ref)

    print("KERNEL_OK")
</pallas_src>

<mosaic_0001>
module attributes {stable_mosaic.version = 11 : i64} {
  func.func @_pearson_moments_kernel(%arg0: i32, %arg1: i32, %arg2: memref<2xf32, #tpu.memory_space<smem>>, %arg3: memref<32x128xf32, #tpu.memory_space<vmem>>, %arg4: memref<32x128xf32, #tpu.memory_space<vmem>>, %arg5: memref<1x5x16x128xf32, #tpu.memory_space<vmem>>) attributes {dimension_semantics = [#tpu.dimension_semantics<parallel>, #tpu.dimension_semantics<arbitrary>], iteration_bounds = array<i64: 1, 1>, scalar_prefetch = 0 : i64, scratch_operands = 0 : i64, tpu.core_type = #tpu.core_type<tc>, window_params = [{transform_indices = @transform_0, window_bounds = array<i64: 2>}, {transform_indices = @transform_1, window_bounds = array<i64: 32, 128>}, {transform_indices = @transform_2, window_bounds = array<i64: 32, 128>}, {transform_indices = @transform_3, window_bounds = array<i64: 1, 5, 16, 128>}]} {
    %c0_i32 = arith.constant 0 : i32
    %0 = arith.cmpi eq, %arg1, %c0_i32 : i32
    %1 = arith.extui %0 : i1 to i32
    %c0_i32_0 = arith.constant 0 : i32
    %2 = arith.cmpi ne, %1, %c0_i32_0 : i32
    scf.if %2 {
      %cst = arith.constant 0.000000e+00 : f32
      %14 = vector.broadcast %cst : f32 to vector<1x5x16x128xf32>
      %c0_5 = arith.constant 0 : index
      %c0_6 = arith.constant 0 : index
      %c0_7 = arith.constant 0 : index
      %c0_8 = arith.constant 0 : index
      %15 = vector.load %arg5[%c0_5, %c0_6, %c0_7, %c0_8] : memref<1x5x16x128xf32, #tpu.memory_space<vmem>>, vector<1x5x16x128xf32>
      tpu.vector_store %arg5[%c0_5, %c0_6, %c0_7, %c0_8], %14 {strides = array<i32>} : memref<1x5x16x128xf32, #tpu.memory_space<vmem>>, vector<1x5x16x128xf32>,
    } else {
    }
    %c0 = arith.constant 0 : index
    %3 = memref.load %arg2[%c0] : memref<2xf32, #tpu.memory_space<smem>>
    %c1 = arith.constant 1 : index
    %4 = memref.load %arg2[%c1] : memref<2xf32, #tpu.memory_space<smem>>
    %c1_i32 = arith.constant 1 : i32
    %5 = arith.muli %arg0, %c1_i32 : i32
    %6 = arith.addi %5, %arg1 : i32
    %c4096_i32 = arith.constant 4096 : i32
    %7 = arith.muli %6, %c4096_i32 : i32
    %c0_i32_1 = arith.constant 0 : i32
    %8 = arith.cmpi slt, %6, %c0_i32_1 : i32
    %9 = arith.extui %8 : i1 to i32
    %c0_i32_2 = arith.constant 0 : i32
    %10 = arith.cmpi ne, %9, %c0_i32_2 : i32
    scf.if %10 {
      %cst = arith.constant 0.000000e+00 : f32
      %14 = vector.broadcast %cst : f32 to vector<16x128xf32>
      %c0_i32_5 = arith.constant 0 : i32
      %c16_i32 = arith.constant 16 : i32
      %15 = arith.muli %c0_i32_5, %c16_i32 : i32
      %16 = tpu.assume_multiple %15, 16 : i32
      %17 = arith.index_cast %16 : i32 to index
      %c0_6 = arith.constant 0 : index
      %18 = vector.load %arg3[%17, %c0_6] : memref<32x128xf32, #tpu.memory_space<vmem>>, vector<16x128xf32>
      %19 = arith.index_cast %16 : i32 to index
      %c0_7 = arith.constant 0 : index
      %20 = vector.load %arg4[%19, %c0_7] : memref<32x128xf32, #tpu.memory_space<vmem>>, vector<16x128xf32>
      %21 = vector.broadcast %3 : f32 to vector<16x128xf32>
      %22 = arith.subf %18, %21 : vector<16x128xf32>
      %23 = vector.broadcast %4 : f32 to vector<16x128xf32>
      %24 = arith.subf %20, %23 : vector<16x128xf32>
      %25 = arith.addf %14, %22 : vector<16x128xf32>
      %26 = arith.addf %14, %24 : vector<16x128xf32>
      %27 = arith.mulf %22, %24 : vector<16x128xf32>
      %28 = arith.addf %14, %27 : vector<16x128xf32>
      %29 = arith.mulf %22, %22 : vector<16x128xf32>
      %30 = arith.addf %14, %29 : vector<16x128xf32>
      %31 = arith.mulf %24, %24 : vector<16x128xf32>
      %32 = arith.addf %14, %31 : vector<16x128xf32>
      %c1_i32_8 = arith.constant 1 : i32
      %c16_i32_9 = arith.constant 16 : i32
      %33 = arith.muli %c1_i32_8, %c16_i32_9 : i32
      %34 = tpu.assume_multiple %33, 16 : i32
      %35 = arith.index_cast %34 : i32 to index
      %c0_10 = arith.constant 0 : index
      %36 = vector.load %arg3[%35, %c0_10] : memref<32x128xf32, #tpu.memory_space<vmem>>, vector<16x128xf32>
      %37 = arith.index_cast %34 : i32 to index
      %c0_11 = arith.constant 0 : index
      %38 = vector.load %arg4[%37, %c0_11] : memref<32x128xf32, #tpu.memory_space<vmem>>, vector<16x128xf32>
      %39 = vector.broadcast %3 : f32 to vector<16x128xf32>
      %40 = arith.subf %36, %39 : vector<16x128xf32>
      %41 = vector.broadcast %4 : f32 to vector<16x128xf32>
      %42 = arith.subf %38, %41 : vector<16x128xf32>
      %43 = arith.addf %25, %40 : vector<16x128xf32>
      %44 = arith.addf %26, %42 : vector<16x128xf32>
      %45 = arith.mulf %40, %42 : vector<16x128xf32>
      %46 = arith.addf %28, %45 : vector<16x128xf32>
      %47 = arith.mulf %40, %40 : vector<16x128xf32>
      %48 = arith.addf %30, %47 : vector<16x128xf32>
      %49 = arith.mulf %42, %42 : vector<16x128xf32>
      %50 = arith.addf %32, %49 : vector<16x128xf32>
      %c2_i32 = arith.constant 2 : i32
      %c0_12 = arith.constant 0 : index
      %c0_13 = arith.constant 0 : index
      %c0_14 = arith.constant 0 : index
      %c0_15 = arith.constant 0 : index
      %51 = vector.load %arg5[%c0_12, %c0_13, %c0_14, %c0_15] : memref<1x5x16x128xf32, #tpu.memory_space<vmem>>, vector<1x1x16x128xf32>
      %52 = vector.shape_cast %51 : vector<1x1x16x128xf32> to vector<16x128xf32>
      %53 = arith.addf %52, %43 : vector<16x128xf32>
      %c0_16 = arith.constant 0 : index
      %c0_17 = arith.constant 0 : index
      %c0_18 = arith.constant 0 : index
      %c0_19 = arith.constant 0 : index
      %54 = vector.load %arg5[%c0_16, %c0_17, %c0_18, %c0_19] : memref<1x5x16x128xf32, #tpu.memory_space<vmem>>, vector<1x1x16x128xf32>
      %55 = vector.shape_cast %54 : vector<1x1x16x128xf32> to vector<16x128xf32>
      %56 = vector.shape_cast %53 : vector<16x128xf32> to vector<1x1x16x128xf32>
      tpu.vector_store %arg5[%c0_16, %c0_17, %c0_18, %c0_19], %56 {strides = array<i32>} : memref<1x5x16x128xf32, #tpu.memory_space<vmem>>, vector<1x1x16x128xf32>,
      %c0_20 = arith.constant 0 : index
      %c1_21 = arith.constant 1 : index
      %c0_22 = arith.constant 0 : index
      %c0_23 = arith.constant 0 : index
      %57 = vector.load %arg5[%c0_20, %c1_21, %c0_22, %c0_23] : memref<1x5x16x128xf32, #tpu.memory_space<vmem>>, vector<1x1x16x128xf32>
      %58 = vector.shape_cast %57 : vector<1x1x16x128xf32> to vector<16x128xf32>
      %59 = arith.addf %58, %44 : vector<16x128xf32>
      %c0_24 = arith.constant 0 : index
      %c1_25 = arith.constant 1 : index
      %c0_26 = arith.constant 0 : index
      %c0_27 = arith.constant 0 : index
      %60 = vector.load %arg5[%c0_24, %c1_25, %c0_26, %c0_27] : memref<1x5x16x128xf32, #tpu.memory_space<vmem>>, vector<1x1x16x128xf32>
      %61 = vector.shape_cast %60 : vector<1x1x16x128xf32> to vector<16x128xf32>
      %62 = vector.shape_cast %59 : vector<16x128xf32> to vector<1x1x16x128xf32>
      tpu.vector_store %arg5[%c0_24, %c1_25, %c0_26, %c0_27], %62 {strides = array<i32>} : memref<1x5x16x128xf32, #tpu.memory_space<vmem>>, vector<1x1x16x128xf32>,
      %c0_28 = arith.constant 0 : index
      %c2 = arith.constant 2 : index
      %c0_29 = arith.constant 0 : index
      %c0_30 = arith.constant 0 : index
      %63 = vector.load %arg5[%c0_28, %c2, %c0_29, %c0_30] : memref<1x5x16x128xf32, #tpu.memory_space<vmem>>, vector<1x1x16x128xf32>
      %64 = vector.shape_cast %63 : vector<1x1x16x128xf32> to vector<16x128xf32>
      %65 = arith.addf %64, %46 : vector<16x128xf32>
      %c0_31 = arith.constant 0 : index
      %c2_32 = arith.constant 2 : index
      %c0_33 = arith.constant 0 : index
      %c0_34 = arith.constant 0 : index
      %66 = vector.load %arg5[%c0_31, %c2_32, %c0_33, %c0_34] : memref<1x5x16x128xf32, #tpu.memory_space<vmem>>, vector<1x1x16x128xf32>
      %67 = vector.shape_cast %66 : vector<1x1x16x128xf32> to vector<16x128xf32>
      %68 = vector.shape_cast %65 : vector<16x128xf32> to vector<1x1x16x128xf32>
      tpu.vector_store %arg5[%c0_31, %c2_32, %c0_33, %c0_34], %68 {strides = array<i32>} : memref<1x5x16x128xf32, #tpu.memory_space<vmem>>, vector<1x1x16x128xf32>,
      %c0_35 = arith.constant 0 : index
      %c3 = arith.constant 3 : index
      %c0_36 = arith.constant 0 : index
      %c0_37 = arith.constant 0 : index
      %69 = vector.load %arg5[%c0_35, %c3, %c0_36, %c0_37] : memref<1x5x16x128xf32, #tpu.memory_space<vmem>>, vector<1x1x16x128xf32>
      %70 = vector.shape_cast %69 : vector<1x1x16x128xf32> to vector<16x128xf32>
      %71 = arith.addf %70, %48 : vector<16x128xf32>
      %c0_38 = arith.constant 0 : index
      %c3_39 = arith.constant 3 : index
      %c0_40 = arith.constant 0 : index
      %c0_41 = arith.constant 0 : index
      %72 = vector.load %arg5[%c0_38, %c3_39, %c0_40, %c0_41] : memref<1x5x16x128xf32, #tpu.memory_space<vmem>>, vector<1x1x16x128xf32>
      %73 = vector.shape_cast %72 : vector<1x1x16x128xf32> to vector<16x128xf32>
      %74 = vector.shape_cast %71 : vector<16x128xf32> to vector<1x1x16x128xf32>
      tpu.vector_store %arg5[%c0_38, %c3_39, %c0_40, %c0_41], %74 {strides = array<i32>} : memref<1x5x16x128xf32, #tpu.memory_space<vmem>>, vector<1x1x16x128xf32>,
      %c0_42 = arith.constant 0 : index
      %c4 = arith.constant 4 : index
      %c0_43 = arith.constant 0 : index
      %c0_44 = arith.constant 0 : index
      %75 = vector.load %arg5[%c0_42, %c4, %c0_43, %c0_44] : memref<1x5x16x128xf32, #tpu.memory_space<vmem>>, vector<1x1x16x128xf32>
      %76 = vector.shape_cast %75 : vector<1x1x16x128xf32> to vector<16x128xf32>
      %77 = arith.addf %76, %50 : vector<16x128xf32>
      %c0_45 = arith.constant 0 : index
      %c4_46 = arith.constant 4 : index
      %c0_47 = arith.constant 0 : index
      %c0_48 = arith.constant 0 : index
      %78 = vector.load %arg5[%c0_45, %c4_46, %c0_47, %c0_48] : memref<1x5x16x128xf32, #tpu.memory_space<vmem>>, vector<1x1x16x128xf32>
      %79 = vector.shape_cast %78 : vector<1x1x16x128xf32> to vector<16x128xf32>
      %80 = vector.shape_cast %77 : vector<16x128xf32> to vector<1x1x16x128xf32>
      tpu.vector_store %arg5[%c0_45, %c4_46, %c0_47, %c0_48], %80 {strides = array<i32>} : memref<1x5x16x128xf32, #tpu.memory_space<vmem>>, vector<1x1x16x128xf32>,
    } else {
    }
    %c0_i32_3 = arith.constant 0 : i32
    %11 = arith.cmpi eq, %6, %c0_i32_3 : i32
    %12 = arith.extui %11 : i1 to i32
    %c0_i32_4 = arith.constant 0 : i32
    %13 = arith.cmpi ne, %12, %c0_i32_4 : i32
    scf.if %13 {
      %cst = arith.constant 0.000000e+00 : f32
      %14 = vector.broadcast %cst : f32 to vector<16x128xf32>
      %15 = tpu.iota {dimensions = array<i32: 0>} : vector<16x128xi32>
      %c128_i32 = arith.constant 128 : i32
      %16 = vector.broadcast %c128_i32 : i32 to vector<16x128xi32>
      %17 = arith.muli %15, %16 : vector<16x128xi32>
      %18 = tpu.iota {dimensions = array<i32: 1>} : vector<16x128xi32>
      %19 = arith.addi %17, %18 : vector<16x128xi32>
      %c0_i32_5 = arith.constant 0 : i32
      %c16_i32 = arith.constant 16 : i32
      %20 = arith.muli %c0_i32_5, %c16_i32 : i32
      %21 = tpu.assume_multiple %20, 16 : i32
      %22 = arith.index_cast %21 : i32 to index
      %c0_6 = arith.constant 0 : index
      %23 = vector.load %arg3[%22, %c0_6] : memref<32x128xf32, #tpu.memory_space<vmem>>, vector<16x128xf32>
      %24 = arith.index_cast %21 : i32 to index
      %c0_7 = arith.constant 0 : index
      %25 = vector.load %arg4[%24, %c0_7] : memref<32x128xf32, #tpu.memory_space<vmem>>, vector<16x128xf32>
      %26 = vector.broadcast %3 : f32 to vector<16x128xf32>
      %27 = arith.subf %23, %26 : vector<16x128xf32>
      %28 = vector.broadcast %4 : f32 to vector<16x128xf32>
      %29 = arith.subf %25, %28 : vector<16x128xf32>
      %c2048_i32 = arith.constant 2048 : i32
      %30 = arith.muli %c0_i32_5, %c2048_i32 : i32
      %31 = arith.addi %7, %30 : i32
      %32 = vector.broadcast %31 : i32 to vector<16x128xi32>
      %33 = arith.addi %19, %32 : vector<16x128xi32>
      %c4096_i32_8 = arith.constant 4096 : i32
      %34 = vector.broadcast %c4096_i32_8 : i32 to vector<16x128xi32>
      %35 = arith.cmpi slt, %33, %34 : vector<16x128xi32>
      %cst_9 = arith.constant 0.000000e+00 : f32
      %36 = vector.broadcast %cst_9 : f32 to vector<16x128xf32>
      %37 = arith.select %35, %27, %36 : vector<16x128xi1>, vector<16x128xf32>
      %cst_10 = arith.constant 0.000000e+00 : f32
      %38 = vector.broadcast %cst_10 : f32 to vector<16x128xf32>
      %39 = arith.select %35, %29, %38 : vector<16x128xi1>, vector<16x128xf32>
      %40 = arith.addf %14, %37 : vector<16x128xf32>
      %41 = arith.addf %14, %39 : vector<16x128xf32>
      %42 = arith.mulf %37, %39 : vector<16x128xf32>
      %43 = arith.addf %14, %42 : vector<16x128xf32>
      %44 = arith.mulf %37, %37 : vector<16x128xf32>
      %45 = arith.addf %14, %44 : vector<16x128xf32>
      %46 = arith.mulf %39, %39 : vector<16x128xf32>
      %47 = arith.addf %14, %46 : vector<16x128xf32>
      %c1_i32_11 = arith.constant 1 : i32
      %c16_i32_12 = arith.constant 16 : i32
      %48 = arith.muli %c1_i32_11, %c16_i32_12 : i32
      %49 = tpu.assume_multiple %48, 16 : i32
      %50 = arith.index_cast %49 : i32 to index
      %c0_13 = arith.constant 0 : index
      %51 = vector.load %arg3[%50, %c0_13] : memref<32x128xf32, #tpu.memory_space<vmem>>, vector<16x128xf32>
      %52 = arith.index_cast %49 : i32 to index
      %c0_14 = arith.constant 0 : index
      %53 = vector.load %arg4[%52, %c0_14] : memref<32x128xf32, #tpu.memory_space<vmem>>, vector<16x128xf32>
      %54 = vector.broadcast %3 : f32 to vector<16x128xf32>
      %55 = arith.subf %51, %54 : vector<16x128xf32>
      %56 = vector.broadcast %4 : f32 to vector<16x128xf32>
      %57 = arith.subf %53, %56 : vector<16x128xf32>
      %c2048_i32_15 = arith.constant 2048 : i32
      %58 = arith.muli %c1_i32_11, %c2048_i32_15 : i32
      %59 = arith.addi %7, %58 : i32
      %60 = vector.broadcast %59 : i32 to vector<16x128xi32>
      %61 = arith.addi %19, %60 : vector<16x128xi32>
      %c4096_i32_16 = arith.constant 4096 : i32
      %62 = vector.broadcast %c4096_i32_16 : i32 to vector<16x128xi32>
      %63 = arith.cmpi slt, %61, %62 : vector<16x128xi32>
      %cst_17 = arith.constant 0.000000e+00 : f32
      %64 = vector.broadcast %cst_17 : f32 to vector<16x128xf32>
      %65 = arith.select %63, %55, %64 : vector<16x128xi1>, vector<16x128xf32>
      %cst_18 = arith.constant 0.000000e+00 : f32
      %66 = vector.broadcast %cst_18 : f32 to vector<16x128xf32>
      %67 = arith.select %63, %57, %66 : vector<16x128xi1>, vector<16x128xf32>
      %68 = arith.addf %40, %65 : vector<16x128xf32>
      %69 = arith.addf %41, %67 : vector<16x128xf32>
      %70 = arith.mulf %65, %67 : vector<16x128xf32>
      %71 = arith.addf %43, %70 : vector<16x128xf32>
      %72 = arith.mulf %65, %65 : vector<16x128xf32>
      %73 = arith.addf %45, %72 : vector<16x128xf32>
      %74 = arith.mulf %67, %67 : vector<16x128xf32>
      %75 = arith.addf %47, %74 : vector<16x128xf32>
      %c2_i32 = arith.constant 2 : i32
      %c0_19 = arith.constant 0 : index
      %c0_20 = arith.constant 0 : index
      %c0_21 = arith.constant 0 : index
      %c0_22 = arith.constant 0 : index
      %76 = vector.load %arg5[%c0_19, %c0_20, %c0_21, %c0_22] : memref<1x5x16x128xf32, #tpu.memory_space<vmem>>, vector<1x1x16x128xf32>
      %77 = vector.shape_cast %76 : vector<1x1x16x128xf32> to vector<16x128xf32>
      %78 = arith.addf %77, %68 : vector<16x128xf32>
      %c0_23 = arith.constant 0 : index
      %c0_24 = arith.constant 0 : index
      %c0_25 = arith.constant 0 : index
      %c0_26 = arith.constant 0 : index
      %79 = vector.load %arg5[%c0_23, %c0_24, %c0_25, %c0_26] : memref<1x5x16x128xf32, #tpu.memory_space<vmem>>, vector<1x1x16x128xf32>
      %80 = vector.shape_cast %79 : vector<1x1x16x128xf32> to vector<16x128xf32>
      %81 = vector.shape_cast %78 : vector<16x128xf32> to vector<1x1x16x128xf32>
      tpu.vector_store %arg5[%c0_23, %c0_24, %c0_25, %c0_26], %81 {strides = array<i32>} : memref<1x5x16x128xf32, #tpu.memory_space<vmem>>, vector<1x1x16x128xf32>,
      %c0_27 = arith.constant 0 : index
      %c1_28 = arith.constant 1 : index
      %c0_29 = arith.constant 0 : index
      %c0_30 = arith.constant 0 : index
      %82 = vector.load %arg5[%c0_27, %c1_28, %c0_29, %c0_30] : memref<1x5x16x128xf32, #tpu.memory_space<vmem>>, vector<1x1x16x128xf32>
      %83 = vector.shape_cast %82 : vector<1x1x16x128xf32> to vector<16x128xf32>
      %84 = arith.addf %83, %69 : vector<16x128xf32>
      %c0_31 = arith.constant 0 : index
      %c1_32 = arith.constant 1 : index
      %c0_33 = arith.constant 0 : index
      %c0_34 = arith.constant 0 : index
      %85 = vector.load %arg5[%c0_31, %c1_32, %c0_33, %c0_34] : memref<1x5x16x128xf32, #tpu.memory_space<vmem>>, vector<1x1x16x128xf32>
      %86 = vector.shape_cast %85 : vector<1x1x16x128xf32> to vector<16x128xf32>
      %87 = vector.shape_cast %84 : vector<16x128xf32> to vector<1x1x16x128xf32>
      tpu.vector_store %arg5[%c0_31, %c1_32, %c0_33, %c0_34], %87 {strides = array<i32>} : memref<1x5x16x128xf32, #tpu.memory_space<vmem>>, vector<1x1x16x128xf32>,
      %c0_35 = arith.constant 0 : index
      %c2 = arith.constant 2 : index
      %c0_36 = arith.constant 0 : index
      %c0_37 = arith.constant 0 : index
      %88 = vector.load %arg5[%c0_35, %c2, %c0_36, %c0_37] : memref<1x5x16x128xf32, #tpu.memory_space<vmem>>, vector<1x1x16x128xf32>
      %89 = vector.shape_cast %88 : vector<1x1x16x128xf32> to vector<16x128xf32>
      %90 = arith.addf %89, %71 : vector<16x128xf32>
      %c0_38 = arith.constant 0 : index
      %c2_39 = arith.constant 2 : index
      %c0_40 = arith.constant 0 : index
      %c0_41 = arith.constant 0 : index
      %91 = vector.load %arg5[%c0_38, %c2_39, %c0_40, %c0_41] : memref<1x5x16x128xf32, #tpu.memory_space<vmem>>, vector<1x1x16x128xf32>
      %92 = vector.shape_cast %91 : vector<1x1x16x128xf32> to vector<16x128xf32>
      %93 = vector.shape_cast %90 : vector<16x128xf32> to vector<1x1x16x128xf32>
      tpu.vector_store %arg5[%c0_38, %c2_39, %c0_40, %c0_41], %93 {strides = array<i32>} : memref<1x5x16x128xf32, #tpu.memory_space<vmem>>, vector<1x1x16x128xf32>,
      %c0_42 = arith.constant 0 : index
      %c3 = arith.constant 3 : index
      %c0_43 = arith.constant 0 : index
      %c0_44 = arith.constant 0 : index
      %94 = vector.load %arg5[%c0_42, %c3, %c0_43, %c0_44] : memref<1x5x16x128xf32, #tpu.memory_space<vmem>>, vector<1x1x16x128xf32>
      %95 = vector.shape_cast %94 : vector<1x1x16x128xf32> to vector<16x128xf32>
      %96 = arith.addf %95, %73 : vector<16x128xf32>
      %c0_45 = arith.constant 0 : index
      %c3_46 = arith.constant 3 : index
      %c0_47 = arith.constant 0 : index
      %c0_48 = arith.constant 0 : index
      %97 = vector.load %arg5[%c0_45, %c3_46, %c0_47, %c0_48] : memref<1x5x16x128xf32, #tpu.memory_space<vmem>>, vector<1x1x16x128xf32>
      %98 = vector.shape_cast %97 : vector<1x1x16x128xf32> to vector<16x128xf32>
      %99 = vector.shape_cast %96 : vector<16x128xf32> to vector<1x1x16x128xf32>
      tpu.vector_store %arg5[%c0_45, %c3_46, %c0_47, %c0_48], %99 {strides = array<i32>} : memref<1x5x16x128xf32, #tpu.memory_space<vmem>>, vector<1x1x16x128xf32>,
      %c0_49 = arith.constant 0 : index
      %c4 = arith.constant 4 : index
      %c0_50 = arith.constant 0 : index
      %c0_51 = arith.constant 0 : index
      %100 = vector.load %arg5[%c0_49, %c4, %c0_50, %c0_51] : memref<1x5x16x128xf32, #tpu.memory_space<vmem>>, vector<1x1x16x128xf32>
      %101 = vector.shape_cast %100 : vector<1x1x16x128xf32> to vector<16x128xf32>
      %102 = arith.addf %101, %75 : vector<16x128xf32>
      %c0_52 = arith.constant 0 : index
      %c4_53 = arith.constant 4 : index
      %c0_54 = arith.constant 0 : index
      %c0_55 = arith.constant 0 : index
      %103 = vector.load %arg5[%c0_52, %c4_53, %c0_54, %c0_55] : memref<1x5x16x128xf32, #tpu.memory_space<vmem>>, vector<1x1x16x128xf32>
      %104 = vector.shape_cast %103 : vector<1x1x16x128xf32> to vector<16x128xf32>
      %105 = vector.shape_cast %102 : vector<16x128xf32> to vector<1x1x16x128xf32>
      tpu.vector_store %arg5[%c0_52, %c4_53, %c0_54, %c0_55], %105 {strides = array<i32>} : memref<1x5x16x128xf32, #tpu.memory_space<vmem>>, vector<1x1x16x128xf32>,
    } else {
    }
    return
  }
  func.func @transform_0(%arg0: i32, %arg1: i32) -> i32 {
    %c0_i32 = arith.constant 0 : i32
    %c0_i32_0 = arith.constant 0 : i32
    return %c0_i32 : i32
  }
  func.func @transform_1(%arg0: i32, %arg1: i32) -> (i32, i32) {
    %c1_i32 = arith.constant 1 : i32
    %0 = arith.muli %arg0, %c1_i32 : i32
    %1 = arith.addi %0, %arg1 : i32
    %c0_i32 = arith.constant 0 : i32
    %2 = arith.minsi %1, %c0_i32 : i32
    %c0_i32_0 = arith.constant 0 : i32
    %c0_i32_1 = arith.constant 0 : i32
    return %2, %c0_i32_0 : i32, i32
  }
  func.func @transform_2(%arg0: i32, %arg1: i32) -> (i32, i32) {
    %c1_i32 = arith.constant 1 : i32
    %0 = arith.muli %arg0, %c1_i32 : i32
    %1 = arith.addi %0, %arg1 : i32
    %c0_i32 = arith.constant 0 : i32
    %2 = arith.minsi %1, %c0_i32 : i32
    %c0_i32_0 = arith.constant 0 : i32
    %c0_i32_1 = arith.constant 0 : i32
    return %2, %c0_i32_0 : i32, i32
  }
  func.func @transform_3(%arg0: i32, %arg1: i32) -> (i32, i32, i32, i32) {
    %c0_i32 = arith.constant 0 : i32
    %c0_i32_0 = arith.constant 0 : i32
    %c0_i32_1 = arith.constant 0 : i32
    %c0_i32_2 = arith.constant 0 : i32
    return %arg0, %c0_i32, %c0_i32_0, %c0_i32_1 : i32, i32, i32, i32
  }
}

</mosaic_0001>

<llo_original>
// kernel: tpu_custom_call.1
$region0: #{tpu_custom_call.1}
  #allocation0 [shape = 'u32[]', space=smem, size = 0x4, offset = 0x4, fixed_abs, tag = 'smem constant byte address 0x4 - core index']
  #allocation1 [shape = 'u32[144,128]{1,0:T(1,128)}', space=vmem, size = 0x12000, scoped, tag = 'internal scratch']
  %s0 = inlined_call_operand.hbm [shape: f32[2], index: 0, kind: input, shape index: {}]
  %s1 = inlined_call_operand.hbm [shape: f32[32,128], index: 1, kind: input, shape index: {}]
  %s2 = inlined_call_operand.hbm [shape: f32[32,128], index: 2, kind: input, shape index: {}]
  %s3 = inlined_call_operand.hbm [shape: f32[1,5,16,128], index: 3, kind: output, shape index: {}]
  %s4 = sld [smem:[#allocation0]]
  $region46: #{tpu_custom_call.1} parent=0
    _
  %s6 = ssub.s32 1, %s4
  %s7 = scalar_select 0, %s6, %s4
  $region1: #{tpu_custom_call.1} parent=0
    #allocation2 [shape = 'u8[512]{0}', space=smem, size = 0x200, scoped, tag = 'input window, operand 0, single buffered']
    #allocation3 [shape = 's32[1]{0}', space=sflag, size = 0x4, scoped, tag = 'scoped memory for tpu_custom_call.1']
    #allocation4 [shape = 's32[1]{0}', space=sflag, size = 0x4, scoped, tag = 'scoped memory for tpu_custom_call.1']
    #allocation5 [shape = 's32[1]{0}', space=sflag, size = 0x4, scoped, tag = 'scoped memory for tpu_custom_call.1']
    #allocation6 [shape = 'u8[16384]{0}', space=vmem, size = 0x4000, scoped, tag = 'input window, operand 1, single buffered']
    #allocation7 [shape = 'u8[16384]{0}', space=vmem, size = 0x4000, scoped, tag = 'input window, operand 2, single buffered']
    #allocation8 [shape = 's32[1]{0}', space=sflag, size = 0x4, scoped, tag = 'scoped memory for tpu_custom_call.1']
    #allocation9 [shape = 'u8[40960]{0}', space=vmem, size = 0xa000, scoped, tag = 'output window, operand 0, single buffered']
    %8 = vsyncpa [#allocation5], 0
    %9 = vsyncpa [#allocation3], 0
    %10 = vsyncpa [#allocation8], 0
    %11 = vsyncpa [#allocation4], 0
    // Predicated region
    $region2: #{tpu_custom_call.1} parent=1 // pred_check
      _
    $region3: #{tpu_custom_call.1} parent=1 // pred_check_branch
      %13 = sbr.rel (0) target = $region5
    $region4: #{tpu_custom_call.1} parent=1 // pred_region
      %s15 = ssub.s32 16, 16
      %16 = vsyncadd [#allocation5], %s15
      %19 = dma.hbm_to_smem %s0, 16, [#allocation2], [#allocation5]
    $region5: #{tpu_custom_call.1} parent=1 // pred_fallthru
      _
    // Predicated region
    $region6: #{tpu_custom_call.1} parent=1 // pred_check
      _
    $region7: #{tpu_custom_call.1} parent=1 // pred_check_branch
      %21 = sbr.rel (0) target = $region9
    $region8: #{tpu_custom_call.1} parent=1 // pred_region
      %s22 = sadd.s32 0, 0
      %p23 = scmp.lt.s32.totalorder %s22, 0
      %s24 = scalar_select %p23, %s22, 0
      %s25 = smul.u32 4, %s24
      %s27 = ssub.s32 512, 512
      %28 = vsyncadd [#allocation3], %s27
      %s29 = smul.addr %s25, 128
      %s30 = scalar_lea.hbm %s1, %s29
      %s31 = sshll.u32 [#allocation6], 4
      %s32 = int_to_ptr.vmem [resolvable:$true] %s31
      %37 = dma.hbm_to_vmem [thread:$0]  %s30, 512, %s32, [#allocation3], 128, 128, 8
    $region9: #{tpu_custom_call.1} parent=1 // pred_fallthru
      _
    // Predicated region
    $region10: #{tpu_custom_call.1} parent=1 // pred_check
      _
    $region11: #{tpu_custom_call.1} parent=1 // pred_check_branch
      %39 = sbr.rel (0) target = $region13
    $region12: #{tpu_custom_call.1} parent=1 // pred_region
      %s40 = sadd.s32 0, 0
      %p41 = scmp.lt.s32.totalorder %s40, 0
      %s42 = scalar_select %p41, %s40, 0
      %s43 = smul.u32 4, %s42
      %s45 = ssub.s32 512, 512
      %46 = vsyncadd [#allocation8], %s45
      %s47 = smul.addr %s43, 128
      %s48 = scalar_lea.hbm %s2, %s47
      %s49 = sshll.u32 [#allocation7], 4
      %s50 = int_to_ptr.vmem [resolvable:$true] %s49
      %55 = dma.hbm_to_vmem [thread:$0]  %s48, 512, %s50, [#allocation8], 128, 128, 8
    $region13: #{tpu_custom_call.1} parent=1 // pred_fallthru
      _
    // Predicated region
    $region14: #{tpu_custom_call.1} parent=1 // pred_check
      _
    $region15: #{tpu_custom_call.1} parent=1 // pred_check_branch
      %57 = sbr.rel (0) target = $region17
    $region16: #{tpu_custom_call.1} parent=1 // pred_region
      %58 = dma.done [#allocation5], 16
    $region17: #{tpu_custom_call.1} parent=1 // pred_fallthru
      _
    // Predicated region
    $region18: #{tpu_custom_call.1} parent=1 // pred_check
      _
    $region19: #{tpu_custom_call.1} parent=1 // pred_check_branch
      %60 = sbr.rel (0) target = $region21
    $region20: #{tpu_custom_call.1} parent=1 // pred_region
      %61 = dma.done [#allocation3], 512
    $region21: #{tpu_custom_call.1} parent=1 // pred_fallthru
      _
    // Predicated region
    $region22: #{tpu_custom_call.1} parent=1 // pred_check
      _
    $region23: #{tpu_custom_call.1} parent=1 // pred_check_branch
      %63 = sbr.rel (0) target = $region25
    $region24: #{tpu_custom_call.1} parent=1 // pred_region
      %64 = dma.done [#allocation8], 512
    $region25: #{tpu_custom_call.1} parent=1 // pred_fallthru
      _
    %65 = sfence
    %s66 = sadd.s32 0, 0
    %p67 = scmp.lt.s32.totalorder %s66, 0
    %s68 = scalar_select %p67, %s66, 0
    %s69 = smul.u32 4, %s68
    %s70 = sadd.s32 0, 0
    %p71 = scmp.lt.s32.totalorder %s70, 0
    %s72 = scalar_select %p71, %s70, 0
    %s73 = smul.u32 4, %s72
    %p74 = scmp.eq.s32.totalorder 0, 0
    // Predicated region
    $region26: #{tpu_custom_call.1} parent=1 // pred_check
      %p75 = pneg %p74
    $region27: #{tpu_custom_call.1} parent=1 // pred_check_branch
      %77 = sbr.rel (%p75) target = $region29
    $region28: #{tpu_custom_call.1} parent=1 // pred_region
      %78 = vst [vmem:[#allocation9] sm:$0xff] 0.0
      %79 = vst [vmem:[#allocation9 + $0x8] sm:$0xff] 0.0
      %80 = vst [vmem:[#allocation9 + $0x10] sm:$0xff] 0.0
      %81 = vst [vmem:[#allocation9 + $0x18] sm:$0xff] 0.0
      %82 = vst [vmem:[#allocation9 + $0x20] sm:$0xff] 0.0
      %83 = vst [vmem:[#allocation9 + $0x28] sm:$0xff] 0.0
      %84 = vst [vmem:[#allocation9 + $0x30] sm:$0xff] 0.0
      %85 = vst [vmem:[#allocation9 + $0x38] sm:$0xff] 0.0
      %86 = vst [vmem:[#allocation9 + $0x40] sm:$0xff] 0.0
      %87 = vst [vmem:[#allocation9 + $0x48] sm:$0xff] 0.0
    $region29: #{tpu_custom_call.1} parent=1 // pred_fallthru
      _
    %s88 = sld [smem:[#allocation2]]
    %s89 = sld [smem:[#allocation2 + $0x1]]
    %s90 = sadd.s32 0, 0
    %s91 = smul.u32 %s90, 4096
    %p92 = scmp.lt.s32.totalorder %s90, 0
    // Predicated region
    $region30: #{tpu_custom_call.1} parent=1 // pred_check
      %p93 = pneg %p92
    $region31: #{tpu_custom_call.1} parent=1 // pred_check_branch
      %95 = sbr.rel (%p93) target = $region33
    $region32: #{tpu_custom_call.1} parent=1 // pred_region
      %v96 = vld [vmem:[#allocation6] sm:$0xff]
      %v97 = vld [vmem:[#allocation6 + $0x8] sm:$0xff]
      %v98 = vld [vmem:[#allocation7] sm:$0xff]
      %v99 = vld [vmem:[#allocation7 + $0x8] sm:$0xff]
      %v100 = vstv %s88
      %v101 = vsub.f32 %v96, %v100
      %v102 = vsub.f32 %v97, %v100
      %v103 = vstv %s89
      %v104 = vsub.f32 %v98, %v103
      %v105 = vsub.f32 %v99, %v103
      %v106 = vadd.f32 %v101, 0.0
      %v107 = vadd.f32 %v102, 0.0
      %v108 = vadd.f32 %v104, 0.0
      %v109 = vadd.f32 %v105, 0.0
      %v110 = vmul.f32 %v101, %v104
      %v111 = vmul.f32 %v102, %v105
      %v112 = vadd.f32 %v110, 0.0
      %v113 = vadd.f32 %v111, 0.0
      %v114 = vmul.f32 %v101, %v101
      %v115 = vmul.f32 %v102, %v102
      %v116 = vadd.f32 %v114, 0.0
      %v117 = vadd.f32 %v115, 0.0
      %v118 = vmul.f32 %v104, %v104
      %v119 = vmul.f32 %v105, %v105
      %v120 = vadd.f32 %v118, 0.0
      %v121 = vadd.f32 %v119, 0.0
      %s122 = scalar_lea.vmem [#allocation6], 16
      %v123 = vld [vmem:[%s122] sm:$0xff]
      %v124 = vld [vmem:[%s122 + $0x8] sm:$0xff]
      %s125 = scalar_lea.vmem [#allocation7], 16
      %v126 = vld [vmem:[%s125] sm:$0xff]
      %v127 = vld [vmem:[%s125 + $0x8] sm:$0xff]
      %v128 = vsub.f32 %v123, %v100
      %v129 = vsub.f32 %v124, %v100
      %v130 = vsub.f32 %v126, %v103
      %v131 = vsub.f32 %v127, %v103
      %v132 = vadd.f32 %v106, %v128
      %v133 = vadd.f32 %v107, %v129
      %v134 = vadd.f32 %v108, %v130
      %v135 = vadd.f32 %v109, %v131
      %v136 = vmul.f32 %v128, %v130
      %v137 = vmul.f32 %v129, %v131
      %v138 = vadd.f32 %v112, %v136
      %v139 = vadd.f32 %v113, %v137
      %v140 = vmul.f32 %v128, %v128
      %v141 = vmul.f32 %v129, %v129
      %v142 = vadd.f32 %v116, %v140
      %v143 = vadd.f32 %v117, %v141
      %v144 = vmul.f32 %v130, %v130
      %v145 = vmul.f32 %v131, %v131
      %v146 = vadd.f32 %v120, %v144
      %v147 = vadd.f32 %v121, %v145
      %v148 = vld [vmem:[#allocation9] sm:$0xff]
      %v149 = vld [vmem:[#allocation9 + $0x8] sm:$0xff]
      %v150 = vadd.f32 %v148, %v132
      %v151 = vadd.f32 %v149, %v133
      %152 = vst [vmem:[#allocation9] sm:$0xff] %v150
      %153 = vst [vmem:[#allocation9 + $0x8] sm:$0xff] %v151
      %s154 = scalar_lea.vmem [#allocation9], 16
      %v155 = vld [vmem:[%s154] sm:$0xff]
      %v156 = vld [vmem:[%s154 + $0x8] sm:$0xff]
      %v157 = vadd.f32 %v155, %v134
      %v158 = vadd.f32 %v156, %v135
      %159 = vst [vmem:[%s154] sm:$0xff] %v157
      %160 = vst [vmem:[%s154 + $0x8] sm:$0xff] %v158
      %s161 = scalar_lea.vmem [#allocation9], 32
      %v162 = vld [vmem:[%s161] sm:$0xff]
      %v163 = vld [vmem:[%s161 + $0x8] sm:$0xff]
      %v164 = vadd.f32 %v162, %v138
      %v165 = vadd.f32 %v163, %v139
      %166 = vst [vmem:[%s161] sm:$0xff] %v164
      %167 = vst [vmem:[%s161 + $0x8] sm:$0xff] %v165
      %s168 = scalar_lea.vmem [#allocation9], 48
      %v169 = vld [vmem:[%s168] sm:$0xff]
      %v170 = vld [vmem:[%s168 + $0x8] sm:$0xff]
      %v171 = vadd.f32 %v169, %v142
      %v172 = vadd.f32 %v170, %v143
      %173 = vst [vmem:[%s168] sm:$0xff] %v171
      %174 = vst [vmem:[%s168 + $0x8] sm:$0xff] %v172
      %s175 = scalar_lea.vmem [#allocation9], 64
      %v176 = vld [vmem:[%s175] sm:$0xff]
      %v177 = vld [vmem:[%s175 + $0x8] sm:$0xff]
      %v178 = vadd.f32 %v176, %v146
      %v179 = vadd.f32 %v177, %v147
      %180 = vst [vmem:[%s175] sm:$0xff] %v178
      %181 = vst [vmem:[%s175 + $0x8] sm:$0xff] %v179
    $region33: #{tpu_custom_call.1} parent=1 // pred_fallthru
      _
    %p182 = scmp.eq.s32.totalorder %s90, 0
    // Predicated region
    $region34: #{tpu_custom_call.1} parent=1 // pred_check
      %p183 = pneg %p182
    $region35: #{tpu_custom_call.1} parent=1 // pred_check_branch
      %185 = sbr.rel (%p183) target = $region37
    $region36: #{tpu_custom_call.1} parent=1 // pred_region
      %v186 = vlaneseq
      %v187 = vshrl.u32 %v186, 7
      %v188 = vadd.s32 %v187, 8
      %v189 = vmul.u32 %v187, 128
      %v190 = vmul.u32 %v188, 128
      %v191 = vlaneseq
      %v192 = vand.u32 %v191, 127
      %v193 = vadd.s32 %v189, %v192
      %v194 = vadd.s32 %v190, %v192
      %v195 = vld [vmem:[#allocation6] sm:$0xff]
      %v196 = vld [vmem:[#allocation6 + $0x8] sm:$0xff]
      %v197 = vld [vmem:[#allocation7] sm:$0xff]
      %v198 = vld [vmem:[#allocation7 + $0x8] sm:$0xff]
      %v199 = vstv %s88
      %v200 = vsub.f32 %v195, %v199
      %v201 = vsub.f32 %v196, %v199
      %v202 = vstv %s89
      %v203 = vsub.f32 %v197, %v202
      %v204 = vsub.f32 %v198, %v202
      %v205 = vstv %s91
      %v206 = vadd.s32 %v193, %v205
      %v207 = vadd.s32 %v194, %v205
      %vm208 = vcmp.lt.s32.totalorder %v206, 4096
      %vm209 = vcmp.lt.s32.totalorder %v207, 4096
      %v210 = vsel %vm208, %v200, 0.0
      %v211 = vsel %vm209, %v201, 0.0
      %v212 = vsel %vm208, %v203, 0.0
      %v213 = vsel %vm209, %v204, 0.0
      %v214 = vadd.f32 %v210, 0.0
      %v215 = vadd.f32 %v211, 0.0
      %v216 = vadd.f32 %v212, 0.0
      %v217 = vadd.f32 %v213, 0.0
      %v218 = vmul.f32 %v210, %v212
      %v219 = vmul.f32 %v211, %v213
      %v220 = vadd.f32 %v218, 0.0
      %v221 = vadd.f32 %v219, 0.0
      %v222 = vmul.f32 %v210, %v210
      %v223 = vmul.f32 %v211, %v211
      %v224 = vadd.f32 %v222, 0.0
      %v225 = vadd.f32 %v223, 0.0
      %v226 = vmul.f32 %v212, %v212
      %v227 = vmul.f32 %v213, %v213
      %v228 = vadd.f32 %v226, 0.0
      %v229 = vadd.f32 %v227, 0.0
      %s230 = scalar_lea.vmem [#allocation6], 16
      %v231 = vld [vmem:[%s230] sm:$0xff]
      %v232 = vld [vmem:[%s230 + $0x8] sm:$0xff]
      %s233 = scalar_lea.vmem [#allocation7], 16
      %v234 = vld [vmem:[%s233] sm:$0xff]
      %v235 = vld [vmem:[%s233 + $0x8] sm:$0xff]
      %v236 = vsub.f32 %v231, %v199
      %v237 = vsub.f32 %v232, %v199
      %v238 = vsub.f32 %v234, %v202
      %v239 = vsub.f32 %v235, %v202
      %s240 = sadd.s32 %s91, 2048
      %v241 = vstv %s240
      %v242 = vadd.s32 %v193, %v241
      %v243 = vadd.s32 %v194, %v241
      %vm244 = vcmp.lt.s32.totalorder %v242, 4096
      %vm245 = vcmp.lt.s32.totalorder %v243, 4096
      %v246 = vsel %vm244, %v236, 0.0
      %v247 = vsel %vm245, %v237, 0.0
      %v248 = vsel %vm244, %v238, 0.0
      %v249 = vsel %vm245, %v239, 0.0
      %v250 = vadd.f32 %v214, %v246
      %v251 = vadd.f32 %v215, %v247
      %v252 = vadd.f32 %v216, %v248
      %v253 = vadd.f32 %v217, %v249
      %v254 = vmul.f32 %v246, %v248
      %v255 = vmul.f32 %v247, %v249
      %v256 = vadd.f32 %v220, %v254
      %v257 = vadd.f32 %v221, %v255
      %v258 = vmul.f32 %v246, %v246
      %v259 = vmul.f32 %v247, %v247
      %v260 = vadd.f32 %v224, %v258
      %v261 = vadd.f32 %v225, %v259
      %v262 = vmul.f32 %v248, %v248
      %v263 = vmul.f32 %v249, %v249
      %v264 = vadd.f32 %v228, %v262
      %v265 = vadd.f32 %v229, %v263
      %v266 = vld [vmem:[#allocation9] sm:$0xff]
      %v267 = vld [vmem:[#allocation9 + $0x8] sm:$0xff]
      %v268 = vadd.f32 %v266, %v250
      %v269 = vadd.f32 %v267, %v251
      %270 = vst [vmem:[#allocation9] sm:$0xff] %v268
      %271 = vst [vmem:[#allocation9 + $0x8] sm:$0xff] %v269
      %s272 = scalar_lea.vmem [#allocation9], 16
      %v273 = vld [vmem:[%s272] sm:$0xff]
      %v274 = vld [vmem:[%s272 + $0x8] sm:$0xff]
      %v275 = vadd.f32 %v273, %v252
      %v276 = vadd.f32 %v274, %v253
      %277 = vst [vmem:[%s272] sm:$0xff] %v275
      %278 = vst [vmem:[%s272 + $0x8] sm:$0xff] %v276
      %s279 = scalar_lea.vmem [#allocation9], 32
      %v280 = vld [vmem:[%s279] sm:$0xff]
      %v281 = vld [vmem:[%s279 + $0x8] sm:$0xff]
      %v282 = vadd.f32 %v280, %v256
      %v283 = vadd.f32 %v281, %v257
      %284 = vst [vmem:[%s279] sm:$0xff] %v282
      %285 = vst [vmem:[%s279 + $0x8] sm:$0xff] %v283
      %s286 = scalar_lea.vmem [#allocation9], 48
      %v287 = vld [vmem:[%s286] sm:$0xff]
      %v288 = vld [vmem:[%s286 + $0x8] sm:$0xff]
      %v289 = vadd.f32 %v287, %v260
      %v290 = vadd.f32 %v288, %v261
      %291 = vst [vmem:[%s286] sm:$0xff] %v289
      %292 = vst [vmem:[%s286 + $0x8] sm:$0xff] %v290
      %s293 = scalar_lea.vmem [#allocation9], 64
      %v294 = vld [vmem:[%s293] sm:$0xff]
      %v295 = vld [vmem:[%s293 + $0x8] sm:$0xff]
      %v296 = vadd.f32 %v294, %v264
      %v297 = vadd.f32 %v295, %v265
      %298 = vst [vmem:[%s293] sm:$0xff] %v296
      %299 = vst [vmem:[%s293 + $0x8] sm:$0xff] %v297
    $region37: #{tpu_custom_call.1} parent=1 // pred_fallthru
      _
    // Predicated region
    $region38: #{tpu_custom_call.1} parent=1 // pred_check
      _
    $region39: #{tpu_custom_call.1} parent=1 // pred_check_branch
      %301 = sbr.rel (0) target = $region41
    $region40: #{tpu_custom_call.1} parent=1 // pred_region
      %s303 = ssub.s32 1280, 1280
      %304 = vsyncadd [#allocation4], %s303
      %s305 = sshll.u32 [#allocation9], 4
      %s306 = int_to_ptr.vmem [resolvable:$true] %s305
      %311 = dma.vmem_to_hbm [thread:$0]  %s306, 1280, %s3, [#allocation4], 128, 128, 8
    $region41: #{tpu_custom_call.1} parent=1 // pred_fallthru
      _
    // Predicated region
    $region42: #{tpu_custom_call.1} parent=1 // pred_check
      _
    $region43: #{tpu_custom_call.1} parent=1 // pred_check_branch
      %313 = sbr.rel (0) target = $region45
    $region44: #{tpu_custom_call.1} parent=1 // pred_region
      %314 = dma.done [#allocation4], 1280
    $region45: #{tpu_custom_call.1} parent=1 // pred_fallthru
      _
    %315 = vsyncpa [#allocation3], 1
    %316 = vsyncpa [#allocation8], 1
    %317 = vsyncpa [#allocation4], 1
    %318 = vsyncpa [#allocation5], 1

</llo_original>
